<compile_context>
chip_gen: v7x
topology: tpu7x:2x2x1
jax: 0.10.0
libtpu: 0.0.40
codegen_flags: <defaults>
</compile_context>

<pallas_src>
import functools

import jax
import jax.numpy as jnp
from jax.experimental import pallas as pl
from jax.experimental.pallas import tpu as pltpu

HIDDEN = 512
FC1 = 126
FC1_PAD = 128          # lane-aligned fc1 width
NCLASS = 6
OUT_PAD = 128          # lane-dense output width (padded logits biased to -1e30)
NEG_BIG = -1e30
FEATURES_LENGTH = {"demo": 64}   # synthetic stand-in for the missing constant


def _device_kind():
    try:
        return jax.devices()[0].device_kind.lower()
    except Exception:
        return ""


def _default_act_dtype():
    kind = _device_kind()
    # bf16 VPU/EUP exists on v6e / v7x; v5e (and unknown chips) keep f32 activations.
    if "v6" in kind or "v7" in kind:
        return jnp.bfloat16
    return jnp.float32


def _auto_block_b(B):
    # The grid is a serial loop on single-TC chips (v5e/v6e) -> single invocation there.
    # Only dual-TC v7x benefits, and only once per-TC work is a few microseconds:
    # use exactly two "parallel" steps.
    kind = _device_kind()
    if "v7" in kind and B >= 2048:
        half = -(-B // 2)
        return ((half + 15) // 16) * 16
    return None


def _lstm_head_kernel(x_ref, wih_ref, bg_ref, w1_ref, b1_ref, w2_ref, b2_ref,
                      out_ref, *, act_dtype):
    """x:(B,F); wih:(F,3H) bf16, gate order [i|o|g]; bg:(1,3H) f32; w1:(H,128) bf16;
    b1:(1,128) f32; w2:(128,128) bf16 (cols>=6 zero); b2:(1,128) f32 (cols>=6 = -1e30);
    out:(B,128) f32 (softmax probs in cols 0..5, ~0 elsewhere)."""
    H = HIDDEN
    x = x_ref[...].astype(jnp.bfloat16)                                    # (B, F)

    # Gate pre-activations. Forget gate & W_hh were dropped in the wrapper — exact,
    # since c0 = h0 = 0 and seq_len = 1.
    gates = (jnp.dot(x, wih_ref[...], preferred_element_type=jnp.float32)
             + bg_ref[...])                                                # (B, 3H) f32
    g = gates.astype(act_dtype)

    # sigmoid(x) = 0.5*(tanh(0.5*x)+1): one EUP push per element instead of exp+recip,
    # applied once to the contiguous [i|o] slab.
    sig = 0.5 * (jnp.tanh(0.5 * g[:, :2 * H]) + 1.0)                       # (B, 2H)
    i_g = sig[:, :H]                                                       # input gate
    o_g = sig[:, H:]                                                       # output gate
    g_g = jnp.tanh(g[:, 2 * H:])                                           # cell candidate
    h1 = o_g * jnp.tanh(i_g * g_g)                                         # (B, H) == hn.squeeze(0)

    # fc1: Linear(512, 126) + ReLU (padded to 128 lanes; padded cols stay exactly 0).
    z1 = (jnp.dot(h1.astype(jnp.bfloat16), w1_ref[...],
                  preferred_element_type=jnp.float32) + b1_ref[...])       # (B, 128)
    a1 = jnp.maximum(z1, 0.0)

    # fc2: Linear(126, 6) + Softmax(-1), lane-dense. Padded logit columns equal -1e30
    # (zero weight cols + -1e30 bias), so exp()->0 and the real softmax is unchanged.
    logits = (jnp.dot(a1.astype(jnp.bfloat16), w2_ref[...],
                      preferred_element_type=jnp.float32) + b2_ref[...])   # (B, 128)
    m = jnp.max(logits, axis=-1, keepdims=True)
    e = jnp.exp(logits - m)
    denom = jnp.sum(e, axis=-1, keepdims=True)
    out_ref[...] = e * pl.reciprocal(denom, approx=True)


def _cost_estimate(B, F):
    flops = 2 * B * (F * 3 * HIDDEN + HIDDEN * FC1_PAD + FC1_PAD * OUT_PAD)
    transcendentals = B * (4 * HIDDEN + OUT_PAD + 1)
    bytes_accessed = (B * F * 4                      # x
                      + F * 3 * HIDDEN * 2           # wih3 (bf16)
                      + 3 * HIDDEN * 4               # b_gates
                      + HIDDEN * FC1_PAD * 2         # w1 (bf16)
                      + FC1_PAD * 4                  # b1
                      + FC1_PAD * OUT_PAD * 2        # w2 (bf16)
                      + OUT_PAD * 4                  # b2
                      + B * OUT_PAD * 4)             # out
    return pl.CostEstimate(flops=flops, transcendentals=transcendentals,
                           bytes_accessed=bytes_accessed)


def lstm_forward(x, p, *, block_b="auto", act_dtype=None):
    """x: (B, F) float32; p: prepared params (see prepare_params). Returns (B, 6) probs."""
    B, F = x.shape
    if act_dtype is None:
        act_dtype = _default_act_dtype()
    kernel = functools.partial(_lstm_head_kernel, act_dtype=act_dtype)
    cost = _cost_estimate(B, F)
    weights = (p["wih3"], p["b_gates"], p["w1p"], p["b1p"], p["w2p"], p["b2p"])

    if block_b == "auto":
        block_b = _auto_block_b(B)
    if block_b is not None:
        block_b = ((int(block_b) + 15) // 16) * 16   # sublane rule (bf16-safe multiple)

    if block_b is None or block_b >= B:
        # Single invocation: everything VMEM-resident, one set of DMAs, zero per-step
        # grid overhead. Best path for single-TC chips and small/medium batches.
        vmem = pl.BlockSpec(memory_space=pltpu.MemorySpace.VMEM)
        out = pl.pallas_call(
            kernel,
            out_shape=jax.ShapeDtypeStruct((B, OUT_PAD), jnp.float32),
            in_specs=[vmem] * (1 + len(weights)),
            out_specs=vmem,
            cost_estimate=cost,
        )(x, *weights)
        return out[:, :NCLASS]

    # Grid path (v7x megacore / very large batches): tile the batch axis; weights are
    # whole-array VMEM residents (fetched once, no double-buffering); batch axis is
    # "parallel" so the two v7x TensorCores split it. x is pre-cast to bf16 to halve
    # the only B-scaled HBM->VMEM DMA.
    x_in = x.astype(jnp.bfloat16)
    grid = (pl.cdiv(B, block_b),)
    vmem_full = pl.BlockSpec(memory_space=pltpu.MemorySpace.VMEM)
    in_specs = ([pl.BlockSpec((block_b, F), lambda i: (i, 0))]
                + [vmem_full] * len(weights))
    out_specs = pl.BlockSpec((block_b, OUT_PAD), lambda i: (i, 0))

    # VMEM headroom check (v7x scoped default is 32 MiB of 64 MiB physical).
    weight_bytes = sum(int(w.size) * w.dtype.itemsize for w in weights)
    per_row = 2 * F * 2 + 2 * OUT_PAD * 4 + 16 * 1024    # dbl-buffered x/out + intermediates
    est = weight_bytes + block_b * per_row
    extra = {}
    if est > 30 * 1024 * 1024:
        extra["vmem_limit_bytes"] = int(min(est + (8 << 20), 56 * 1024 * 1024))

    out = pl.pallas_call(
        kernel,
        out_shape=jax.ShapeDtypeStruct((B, OUT_PAD), jnp.float32),
        grid=grid,
        in_specs=in_specs,
        out_specs=out_specs,
        cost_estimate=cost,
        compiler_params=pltpu.CompilerParams(
            dimension_semantics=("parallel",), **extra),
    )(x_in, *weights)
    return out[:, :NCLASS]


def init_params(key, feat_len):
    """Parameters in native PyTorch layout (nn.LSTM gate order [i, f, g, o])."""
    ks = jax.random.split(key, 7)
    s = 1.0 / jnp.sqrt(HIDDEN)
    weight_ih = jax.random.uniform(ks[0], (4 * HIDDEN, feat_len), jnp.float32, -s, s)
    bias_ih = jax.random.uniform(ks[1], (4 * HIDDEN,), jnp.float32, -s, s)
    bias_hh = jax.random.uniform(ks[2], (4 * HIDDEN,), jnp.float32, -s, s)
    fc1_w = jax.random.uniform(ks[3], (FC1, HIDDEN), jnp.float32, -s, s)
    fc1_b = jax.random.uniform(ks[4], (FC1,), jnp.float32, -s, s)
    s2 = 1.0 / jnp.sqrt(FC1)
    fc2_w = jax.random.uniform(ks[5], (NCLASS, FC1), jnp.float32, -s2, s2)
    fc2_b = jax.random.uniform(ks[6], (NCLASS,), jnp.float32, -s2, s2)
    # weight_hh_l0 is mathematically unused (h0 == 0, seq_len == 1); not materialized.
    return dict(weight_ih_l0=weight_ih, bias_ih_l0=bias_ih, bias_hh_l0=bias_hh,
                fc1_w=fc1_w, fc1_b=fc1_b, fc2_w=fc2_w, fc2_b=fc2_b)


def prepare_params(p):
    """Trace-time preprocessing: drop forget gate / W_hh, fold biases, reorder gates to
    [i|o|g], pad fc1 126->128 and fc2 out 6->128 (-1e30 bias pad), cast weights to bf16."""
    H = HIDDEN
    wih_t = p["weight_ih_l0"].T                                   # (F, 4H), order [i,f,g,o]
    b_all = (p["bias_ih_l0"] + p["bias_hh_l0"])[None, :]          # (1, 4H) folded

    def iog(a):   # keep [i, o, g]; the forget gate multiplies c0 == 0 -> dropped exactly.
        return jnp.concatenate([a[:, 0:H], a[:, 3 * H:4 * H], a[:, 2 * H:3 * H]], axis=1)

    wih3 = iog(wih_t)                                             # (F, 3H)
    b_gates = iog(b_all)                                          # (1, 3H)

    pad1 = FC1_PAD - FC1
    w1p = jnp.pad(p["fc1_w"].T, ((0, 0), (0, pad1)))              # (512, 128)
    b1p = jnp.pad(p["fc1_b"][None, :], ((0, 0), (0, pad1)))       # (1, 128)

    padc = OUT_PAD - NCLASS
    w2p = jnp.pad(p["fc2_w"].T, ((0, pad1), (0, padc)))           # (128, 128), pads zero
    b2p = jnp.pad(p["fc2_b"][None, :], ((0, 0), (0, padc)),
                  constant_values=NEG_BIG)                        # (1, 128), pads -1e30

    return dict(
        wih3=wih3.astype(jnp.bfloat16),
        b_gates=b_gates.astype(jnp.float32),
        w1p=w1p.astype(jnp.bfloat16),
        b1p=b1p.astype(jnp.float32),
        w2p=w2p.astype(jnp.bfloat16),
        b2p=b2p.astype(jnp.float32),
    )


def reference_forward(x, p, act_dtype):
    """Pure-JAX reference mirroring the kernel's numerics (exact softmax divide)."""
    H = HIDDEN
    f32 = jnp.float32
    xb = x.astype(jnp.bfloat16).astype(f32)
    gates = xb @ p["wih3"].astype(f32) + p["b_gates"]             # [i | o | g]
    g = gates.astype(act_dtype)
    sig = 0.5 * (jnp.tanh(0.5 * g[:, :2 * H]) + 1.0)
    i_g, o_g = sig[:, :H], sig[:, H:]
    g_g = jnp.tanh(g[:, 2 * H:])
    h1 = o_g * jnp.tanh(i_g * g_g)
    h1b = h1.astype(jnp.bfloat16).astype(f32)
    a1 = jnp.maximum(h1b @ p["w1p"].astype(f32) + p["b1p"], 0.0)
    a1b = a1.astype(jnp.bfloat16).astype(f32)
    logits = a1b @ p["w2p"].astype(f32) + p["b2p"]
    return jax.nn.softmax(logits, axis=-1)[:, :NCLASS]


if __name__ == "__main__":
    feature_type = "demo"
    feat_len = FEATURES_LENGTH[feature_type]

    key = jax.random.PRNGKey(0)
    kx, kp, kxb = jax.random.split(key, 3)
    params = prepare_params(init_params(kp, feat_len))
    act_dtype = _default_act_dtype()

    # Small-batch path (matches the PyTorch forward(x2, x) with seq_len == 1).
    B = 8
    x = jax.random.normal(kx, (B, feat_len), jnp.float32)
    x2 = jnp.zeros((B, 1), jnp.float32)   # unused by the forward pass, kept for parity
    y = jax.block_until_ready(lstm_forward(x, params, act_dtype=act_dtype))
    y_ref = reference_forward(x, params, act_dtype)
    assert y.shape == (B, NCLASS)
    assert bool(jnp.allclose(jnp.sum(y, axis=-1), 1.0, atol=1e-2))
    assert bool(jnp.allclose(y, y_ref, atol=1e-2))

    # Batch-tiled path (weights VMEM-resident, "parallel" batch axis for v7x megacore).
    B2 = 256
    xb = jax.random.normal(kxb, (B2, feat_len), jnp.float32)
    y2 = jax.block_until_ready(lstm_forward(xb, params, block_b=128, act_dtype=act_dtype))
    y2_ref = reference_forward(xb, params, act_dtype)
    assert y2.shape == (B2, NCLASS)
    assert bool(jnp.allclose(jnp.sum(y2, axis=-1), 1.0, atol=1e-2))
    assert bool(jnp.allclose(y2, y2_ref, atol=1e-2))

    print("KERNEL_OK")
</pallas_src>

<mosaic_0001>
module attributes {stable_mosaic.version = 11 : i64} {
  func.func @_lstm_head_kernel(%arg0: memref<8x64xf32, #tpu.memory_space<vmem>>, %arg1: memref<64x1536xbf16, #tpu.memory_space<vmem>>, %arg2: memref<1x1536xf32, #tpu.memory_space<vmem>>, %arg3: memref<512x128xbf16, #tpu.memory_space<vmem>>, %arg4: memref<1x128xf32, #tpu.memory_space<vmem>>, %arg5: memref<128x128xbf16, #tpu.memory_space<vmem>>, %arg6: memref<1x128xf32, #tpu.memory_space<vmem>>, %arg7: memref<8x128xf32, #tpu.memory_space<vmem>>) attributes {dimension_semantics = [], scalar_prefetch = 0 : i64, scratch_operands = 0 : i64, tpu.core_type = #tpu.core_type<tc>} {
    %c0 = arith.constant 0 : index
    %c0_0 = arith.constant 0 : index
    %0 = vector.load %arg0[%c0, %c0_0] : memref<8x64xf32, #tpu.memory_space<vmem>>, vector<8x64xf32>
    %1 = arith.truncf %0 : vector<8x64xf32> to vector<8x64xbf16>
    %c0_1 = arith.constant 0 : index
    %c0_2 = arith.constant 0 : index
    %2 = vector.load %arg1[%c0_1, %c0_2] : memref<64x1536xbf16, #tpu.memory_space<vmem>>, vector<64x1536xbf16>
    %cst = arith.constant dense<0.000000e+00> : vector<8x1536xf32>
    %3 = tpu.matmul %1, %2, %cst {dimension_numbers = #tpu.dot_dimension_numbers<[1], [0], [0], [1], [0, 0, 1, 1], [], []>} : vector<8x64xbf16>, vector<64x1536xbf16>, vector<8x1536xf32> -> vector<8x1536xf32>
    %c0_3 = arith.constant 0 : index
    %c0_4 = arith.constant 0 : index
    %4 = vector.load %arg2[%c0_3, %c0_4] : memref<1x1536xf32, #tpu.memory_space<vmem>>, vector<1x1536xf32>
    %5 = vector.broadcast %4 : vector<1x1536xf32> to vector<8x1536xf32>
    %6 = arith.addf %3, %5 : vector<8x1536xf32>
    %7 = vector.extract_strided_slice %6 {offsets = [0, 0], sizes = [8, 1024], strides = [1, 1]} : vector<8x1536xf32> to vector<8x1024xf32>
    %cst_5 = arith.constant 5.000000e-01 : f32
    %8 = vector.broadcast %cst_5 : f32 to vector<8x1024xf32>
    %9 = arith.mulf %8, %7 : vector<8x1024xf32>
    %10 = math.tanh %9 : vector<8x1024xf32>
    %cst_6 = arith.constant 1.000000e+00 : f32
    %11 = vector.broadcast %cst_6 : f32 to vector<8x1024xf32>
    %12 = arith.addf %10, %11 : vector<8x1024xf32>
    %cst_7 = arith.constant 5.000000e-01 : f32
    %13 = vector.broadcast %cst_7 : f32 to vector<8x1024xf32>
    %14 = arith.mulf %13, %12 : vector<8x1024xf32>
    %15 = vector.extract_strided_slice %14 {offsets = [0, 0], sizes = [8, 512], strides = [1, 1]} : vector<8x1024xf32> to vector<8x512xf32>
    %16 = vector.extract_strided_slice %14 {offsets = [0, 512], sizes = [8, 512], strides = [1, 1]} : vector<8x1024xf32> to vector<8x512xf32>
    %17 = vector.extract_strided_slice %6 {offsets = [0, 1024], sizes = [8, 512], strides = [1, 1]} : vector<8x1536xf32> to vector<8x512xf32>
    %18 = math.tanh %17 : vector<8x512xf32>
    %19 = arith.mulf %15, %18 : vector<8x512xf32>
    %20 = math.tanh %19 : vector<8x512xf32>
    %21 = arith.mulf %16, %20 : vector<8x512xf32>
    %22 = arith.truncf %21 : vector<8x512xf32> to vector<8x512xbf16>
    %c0_8 = arith.constant 0 : index
    %c0_9 = arith.constant 0 : index
    %23 = vector.load %arg3[%c0_8, %c0_9] : memref<512x128xbf16, #tpu.memory_space<vmem>>, vector<512x128xbf16>
    %cst_10 = arith.constant dense<0.000000e+00> : vector<8x128xf32>
    %24 = tpu.matmul %22, %23, %cst_10 {dimension_numbers = #tpu.dot_dimension_numbers<[1], [0], [0], [1], [0, 0, 1, 1], [], []>} : vector<8x512xbf16>, vector<512x128xbf16>, vector<8x128xf32> -> vector<8x128xf32>
    %c0_11 = arith.constant 0 : index
    %c0_12 = arith.constant 0 : index
    %25 = vector.load %arg4[%c0_11, %c0_12] : memref<1x128xf32, #tpu.memory_space<vmem>>, vector<1x128xf32>
    %26 = vector.broadcast %25 : vector<1x128xf32> to vector<8x128xf32>
    %27 = arith.addf %24, %26 : vector<8x128xf32>
    %cst_13 = arith.constant 0.000000e+00 : f32
    %28 = vector.broadcast %cst_13 : f32 to vector<8x128xf32>
    %29 = arith.maximumf %27, %28 : vector<8x128xf32>
    %30 = arith.truncf %29 : vector<8x128xf32> to vector<8x128xbf16>
    %c0_14 = arith.constant 0 : index
    %c0_15 = arith.constant 0 : index
    %31 = vector.load %arg5[%c0_14, %c0_15] : memref<128x128xbf16, #tpu.memory_space<vmem>>, vector<128x128xbf16>
    %cst_16 = arith.constant dense<0.000000e+00> : vector<8x128xf32>
    %32 = tpu.matmul %30, %31, %cst_16 {dimension_numbers = #tpu.dot_dimension_numbers<[1], [0], [0], [1], [0, 0, 1, 1], [], []>} : vector<8x128xbf16>, vector<128x128xbf16>, vector<8x128xf32> -> vector<8x128xf32>
    %c0_17 = arith.constant 0 : index
    %c0_18 = arith.constant 0 : index
    %33 = vector.load %arg6[%c0_17, %c0_18] : memref<1x128xf32, #tpu.memory_space<vmem>>, vector<1x128xf32>
    %34 = vector.broadcast %33 : vector<1x128xf32> to vector<8x128xf32>
    %35 = arith.addf %32, %34 : vector<8x128xf32>
    %cst_19 = arith.constant dense<0xFF800000> : vector<8xf32>
    %36 = vector.multi_reduction <maximumf>, %35, %cst_19 [1] : vector<8x128xf32> to vector<8xf32>
    %37 = vector.shape_cast %36 : vector<8xf32> to vector<8x1xf32>
    %38 = vector.broadcast %37 : vector<8x1xf32> to vector<8x128xf32>
    %39 = arith.subf %35, %38 : vector<8x128xf32>
    %40 = math.exp %39 : vector<8x128xf32>
    %cst_20 = arith.constant dense<0.000000e+00> : vector<8xf32>
    %41 = vector.multi_reduction <add>, %40, %cst_20 [1] : vector<8x128xf32> to vector<8xf32>
    %42 = vector.shape_cast %41 : vector<8xf32> to vector<8x1xf32>
    %43 = tpu.reciprocal %42 {approx = true} : vector<8x1xf32> -> vector<8x1xf32>
    %44 = vector.broadcast %43 : vector<8x1xf32> to vector<8x128xf32>
    %45 = arith.mulf %40, %44 : vector<8x128xf32>
    %c0_21 = arith.constant 0 : index
    %c0_22 = arith.constant 0 : index
    %46 = vector.load %arg7[%c0_21, %c0_22] : memref<8x128xf32, #tpu.memory_space<vmem>>, vector<8x128xf32>
    tpu.vector_store %arg7[%c0_21, %c0_22], %45 {strides = array<i32>} : memref<8x128xf32, #tpu.memory_space<vmem>>, vector<8x128xf32>,
    return
  }
}

</mosaic_0001>

<llo_original>
// kernel: tpu_custom_call.1
$region0: #{tpu_custom_call.1}
  #allocation0 [shape = 'u32[]', space=smem, size = 0x4, offset = 0x4, fixed_abs, tag = 'smem constant byte address 0x4 - core index']
  #allocation1 [shape = 'u32[144,128]{1,0:T(1,128)}', space=vmem, size = 0x12000, scoped, tag = 'internal scratch']
  %s0 = inlined_call_operand.hbm [shape: f32[8,64], index: 0, kind: input, shape index: {}]
  %s1 = inlined_call_operand.hbm [shape: bf16[64,1536], index: 1, kind: input, shape index: {}]
  %s2 = inlined_call_operand.hbm [shape: f32[1,1536], index: 2, kind: input, shape index: {}]
  %s3 = inlined_call_operand.hbm [shape: bf16[512,128], index: 3, kind: input, shape index: {}]
  %s4 = inlined_call_operand.vmem [shape: f32[1,128], index: 4, kind: input, shape index: {}]
  %s5 = inlined_call_operand.hbm [shape: bf16[128,128], index: 5, kind: input, shape index: {}]
  %s6 = inlined_call_operand.vmem [shape: f32[1,128], index: 6, kind: input, shape index: {}]
  %s7 = inlined_call_operand.hbm [shape: f32[8,128], index: 7, kind: output, shape index: {}]
  %s8 = sld [smem:[#allocation0]]
  $region58: #{tpu_custom_call.1} parent=0
    _
  %s10 = ssub.s32 1, %s8
  %s11 = scalar_select 0, %s10, %s8
  $region1: #{tpu_custom_call.1} parent=0
    #allocation2 [shape = 'u8[4096]{0}', space=vmem, size = 0x1000, scoped, tag = 'input window, operand 0, single buffered']
    #allocation3 [shape = 's32[1]{0}', space=sflag, size = 0x4, scoped, tag = 'scoped memory for tpu_custom_call.1']
    #allocation4 [shape = 's32[1]{0}', space=sflag, size = 0x4, scoped, tag = 'scoped memory for tpu_custom_call.1']
    #allocation5 [shape = 'u8[196608]{0}', space=vmem, size = 0x30000, scoped, tag = 'input window, operand 1, single buffered']
    #allocation6 [shape = 's32[1]{0}', space=sflag, size = 0x4, scoped, tag = 'scoped memory for tpu_custom_call.1']
    #allocation7 [shape = 'u8[6144]{0}', space=vmem, size = 0x1800, scoped, tag = 'input window, operand 2, single buffered']
    #allocation8 [shape = 'u8[131072]{0}', space=vmem, size = 0x20000, scoped, tag = 'input window, operand 3, single buffered']
    #allocation9 [shape = 's32[1]{0}', space=sflag, size = 0x4, scoped, tag = 'scoped memory for tpu_custom_call.1']
    #allocation10 [shape = 'u8[32768]{0}', space=vmem, size = 0x8000, scoped, tag = 'input window, operand 5, single buffered']
    #allocation11 [shape = 'u8[4096]{0}', space=vmem, size = 0x1000, scoped, tag = 'output window, operand 0, single buffered']
    %12 = vsyncpa [#allocation3], 0
    %13 = vsyncpa [#allocation6], 0
    %14 = vsyncpa [#allocation9], 0
    %15 = vsyncpa [#allocation4], 0
    // Predicated region
    $region2: #{tpu_custom_call.1} parent=1 // pred_check
      _
    $region3: #{tpu_custom_call.1} parent=1 // pred_check_branch
      %17 = sbr.rel (0) target = $region5
    $region4: #{tpu_custom_call.1} parent=1 // pred_region
      %s19 = ssub.s32 128, 128
      %20 = vsyncadd [#allocation3], %s19
      %s22 = sshll.u32 [#allocation2], 4
      %s23 = int_to_ptr.vmem [resolvable:$true] %s22
      %25 = dma.hbm_to_vmem [thread:$0]  %s0, 128, %s23, [#allocation3]
    $region5: #{tpu_custom_call.1} parent=1 // pred_fallthru
      _
    // Predicated region
    $region6: #{tpu_custom_call.1} parent=1 // pred_check
      _
    $region7: #{tpu_custom_call.1} parent=1 // pred_check_branch
      %27 = sbr.rel (0) target = $region9
    $region8: #{tpu_custom_call.1} parent=1 // pred_region
      %s29 = ssub.s32 6144, 6144
      %30 = vsyncadd [#allocation6], %s29
      %s31 = sshll.u32 [#allocation5], 4
      %s32 = int_to_ptr.vmem [resolvable:$true] %s31
      %37 = dma.hbm_to_vmem [thread:$0]  %s1, 6144, %s32, [#allocation6], 768, 768, 48
    $region9: #{tpu_custom_call.1} parent=1 // pred_fallthru
      _
    // Predicated region
    $region10: #{tpu_custom_call.1} parent=1 // pred_check
      _
    $region11: #{tpu_custom_call.1} parent=1 // pred_check_branch
      %39 = sbr.rel (0) target = $region13
    $region12: #{tpu_custom_call.1} parent=1 // pred_region
      %s41 = ssub.s32 192, 192
      %42 = vsyncadd [#allocation6], %s41
      %s44 = sshll.u32 [#allocation7], 4
      %s45 = int_to_ptr.vmem [resolvable:$true] %s44
      %47 = dma.hbm_to_vmem [thread:$0]  %s2, 192, %s45, [#allocation6]
    $region13: #{tpu_custom_call.1} parent=1 // pred_fallthru
      _
    // Predicated region
    $region14: #{tpu_custom_call.1} parent=1 // pred_check
      _
    $region15: #{tpu_custom_call.1} parent=1 // pred_check_branch
      %49 = sbr.rel (0) target = $region17
    $region16: #{tpu_custom_call.1} parent=1 // pred_region
      %s51 = ssub.s32 4096, 4096
      %52 = vsyncadd [#allocation9], %s51
      %s53 = sshll.u32 [#allocation8], 4
      %s54 = int_to_ptr.vmem [resolvable:$true] %s53
      %59 = dma.hbm_to_vmem [thread:$0]  %s3, 4096, %s54, [#allocation9], 64, 64, 4
    $region17: #{tpu_custom_call.1} parent=1 // pred_fallthru
      _
    // Predicated region
    $region18: #{tpu_custom_call.1} parent=1 // pred_check
      _
    $region19: #{tpu_custom_call.1} parent=1 // pred_check_branch
      %61 = sbr.rel (0) target = $region21
    $region20: #{tpu_custom_call.1} parent=1 // pred_region
      _
    $region21: #{tpu_custom_call.1} parent=1 // pred_fallthru
      _
    // Predicated region
    $region22: #{tpu_custom_call.1} parent=1 // pred_check
      _
    $region23: #{tpu_custom_call.1} parent=1 // pred_check_branch
      %63 = sbr.rel (0) target = $region25
    $region24: #{tpu_custom_call.1} parent=1 // pred_region
      %s65 = ssub.s32 1024, 1024
      %66 = vsyncadd [#allocation9], %s65
      %s67 = sshll.u32 [#allocation10], 4
      %s68 = int_to_ptr.vmem [resolvable:$true] %s67
      %73 = dma.hbm_to_vmem [thread:$0]  %s5, 1024, %s68, [#allocation9], 64, 64, 4
    $region25: #{tpu_custom_call.1} parent=1 // pred_fallthru
      _
    // Predicated region
    $region26: #{tpu_custom_call.1} parent=1 // pred_check
      _
    $region27: #{tpu_custom_call.1} parent=1 // pred_check_branch
      %75 = sbr.rel (0) target = $region29
    $region28: #{tpu_custom_call.1} parent=1 // pred_region
      _
    $region29: #{tpu_custom_call.1} parent=1 // pred_fallthru
      _
    // Predicated region
    $region30: #{tpu_custom_call.1} parent=1 // pred_check
      _
    $region31: #{tpu_custom_call.1} parent=1 // pred_check_branch
      %77 = sbr.rel (0) target = $region33
    $region32: #{tpu_custom_call.1} parent=1 // pred_region
      %78 = dma.done [#allocation3], 128
    $region33: #{tpu_custom_call.1} parent=1 // pred_fallthru
      _
    // Predicated region
    $region34: #{tpu_custom_call.1} parent=1 // pred_check
      _
    $region35: #{tpu_custom_call.1} parent=1 // pred_check_branch
      %80 = sbr.rel (0) target = $region37
    $region36: #{tpu_custom_call.1} parent=1 // pred_region
      %81 = dma.done [#allocation6], 6144
    $region37: #{tpu_custom_call.1} parent=1 // pred_fallthru
      _
    // Predicated region
    $region38: #{tpu_custom_call.1} parent=1 // pred_check
      _
    $region39: #{tpu_custom_call.1} parent=1 // pred_check_branch
      %83 = sbr.rel (0) target = $region41
    $region40: #{tpu_custom_call.1} parent=1 // pred_region
      %84 = dma.done [#allocation6], 192
    $region41: #{tpu_custom_call.1} parent=1 // pred_fallthru
      _
    // Predicated region
    $region42: #{tpu_custom_call.1} parent=1 // pred_check
      _
    $region43: #{tpu_custom_call.1} parent=1 // pred_check_branch
      %86 = sbr.rel (0) target = $region45
    $region44: #{tpu_custom_call.1} parent=1 // pred_region
      %87 = dma.done [#allocation9], 4096
    $region45: #{tpu_custom_call.1} parent=1 // pred_fallthru
      _
    // Predicated region
    $region46: #{tpu_custom_call.1} parent=1 // pred_check
      _
    $region47: #{tpu_custom_call.1} parent=1 // pred_check_branch
      %89 = sbr.rel (0) target = $region49
    $region48: #{tpu_custom_call.1} parent=1 // pred_region
      %90 = dma.done [#allocation9], 1024
    $region49: #{tpu_custom_call.1} parent=1 // pred_fallthru
      _
    %v92 = vld [vmem:[#allocation2] sm:$0xff]
    %v93 = vpack.c.bf16 %v92, %v92
    %v94 = vld [vmem:[#allocation5] sm:$0xff]
    %v95 = vld [vmem:[#allocation5 + $0x8] sm:$0xff]
    %v96 = vld [vmem:[#allocation5 + $0x10] sm:$0xff]
    %v97 = vld [vmem:[#allocation5 + $0x18] sm:$0xff]
    %v98 = vld [vmem:[#allocation5 + $0x20] sm:$0xff]
    %v99 = vld [vmem:[#allocation5 + $0x28] sm:$0xff]
    %v100 = vld [vmem:[#allocation5 + $0x30] sm:$0xff]
    %v101 = vld [vmem:[#allocation5 + $0x38] sm:$0xff]
    %v102 = vld [vmem:[#allocation5 + $0x40] sm:$0xff]
    %v103 = vld [vmem:[#allocation5 + $0x48] sm:$0xff]
    %v104 = vld [vmem:[#allocation5 + $0x50] sm:$0xff]
    %v105 = vld [vmem:[#allocation5 + $0x58] sm:$0xff]
    %v106 = vld [vmem:[#allocation5 + $0x60] sm:$0xff]
    %v107 = vld [vmem:[#allocation5 + $0x68] sm:$0xff]
    %v108 = vld [vmem:[#allocation5 + $0x70] sm:$0xff]
    %v109 = vld [vmem:[#allocation5 + $0x78] sm:$0xff]
    %v110 = vld [vmem:[#allocation5 + $0x80] sm:$0xff]
    %v111 = vld [vmem:[#allocation5 + $0x88] sm:$0xff]
    %v112 = vld [vmem:[#allocation5 + $0x90] sm:$0xff]
    %v113 = vld [vmem:[#allocation5 + $0x98] sm:$0xff]
    %v114 = vld [vmem:[#allocation5 + $0xa0] sm:$0xff]
    %v115 = vld [vmem:[#allocation5 + $0xa8] sm:$0xff]
    %v116 = vld [vmem:[#allocation5 + $0xb0] sm:$0xff]
    %v117 = vld [vmem:[#allocation5 + $0xb8] sm:$0xff]
    %v118 = vld [vmem:[#allocation5 + $0xc0] sm:$0xff]
    %v119 = vld [vmem:[#allocation5 + $0xc8] sm:$0xff]
    %v120 = vld [vmem:[#allocation5 + $0xd0] sm:$0xff]
    %v121 = vld [vmem:[#allocation5 + $0xd8] sm:$0xff]
    %v122 = vld [vmem:[#allocation5 + $0xe0] sm:$0xff]
    %v123 = vld [vmem:[#allocation5 + $0xe8] sm:$0xff]
    %v124 = vld [vmem:[#allocation5 + $0xf0] sm:$0xff]
    %v125 = vld [vmem:[#allocation5 + $0xf8] sm:$0xff]
    %v126 = vld [vmem:[#allocation5 + $0x100] sm:$0xff]
    %v127 = vld [vmem:[#allocation5 + $0x108] sm:$0xff]
    %v128 = vld [vmem:[#allocation5 + $0x110] sm:$0xff]
    %v129 = vld [vmem:[#allocation5 + $0x118] sm:$0xff]
    %v130 = vld [vmem:[#allocation5 + $0x120] sm:$0xff]
    %v131 = vld [vmem:[#allocation5 + $0x128] sm:$0xff]
    %v132 = vld [vmem:[#allocation5 + $0x130] sm:$0xff]
    %v133 = vld [vmem:[#allocation5 + $0x138] sm:$0xff]
    %v134 = vld [vmem:[#allocation5 + $0x140] sm:$0xff]
    %v135 = vld [vmem:[#allocation5 + $0x148] sm:$0xff]
    %v136 = vld [vmem:[#allocation5 + $0x150] sm:$0xff]
    %v137 = vld [vmem:[#allocation5 + $0x158] sm:$0xff]
    %v138 = vld [vmem:[#allocation5 + $0x160] sm:$0xff]
    %v139 = vld [vmem:[#allocation5 + $0x168] sm:$0xff]
    %v140 = vld [vmem:[#allocation5 + $0x170] sm:$0xff]
    %v141 = vld [vmem:[#allocation5 + $0x178] sm:$0xff]
    %v142 = vld [vmem:[#allocation7] sm:$0xff]
    %v143 = vld [vmem:[#allocation7 + $0x8] sm:$0xf]
    %v146 = vlaneseq
    %v147 = vshrl.u32 %v146, 7
    %v148 = vsub.s32 0, %v147
    %v149 = vrot.slane %v142, %v148
    %v150 = vlaneseq
    %v151 = vshrl.u32 %v150, 7
    %v152 = vsub.s32 1, %v151
    %v153 = vrot.slane %v142, %v152
    %v154 = vlaneseq
    %v155 = vshrl.u32 %v154, 7
    %v156 = vsub.s32 2, %v155
    %v157 = vrot.slane %v142, %v156
    %v158 = vlaneseq
    %v159 = vshrl.u32 %v158, 7
    %v160 = vsub.s32 3, %v159
    %v161 = vrot.slane %v142, %v160
    %v162 = vlaneseq
    %v163 = vshrl.u32 %v162, 7
    %v164 = vsub.s32 4, %v163
    %v165 = vrot.slane %v142, %v164
    %v166 = vlaneseq
    %v167 = vshrl.u32 %v166, 7
    %v168 = vsub.s32 5, %v167
    %v169 = vrot.slane %v142, %v168
    %v170 = vlaneseq
    %v171 = vshrl.u32 %v170, 7
    %v172 = vsub.s32 6, %v171
    %v173 = vrot.slane %v142, %v172
    %v174 = vlaneseq
    %v175 = vshrl.u32 %v174, 7
    %v176 = vsub.s32 7, %v175
    %v177 = vrot.slane %v142, %v176
    %v178 = vlaneseq
    %v179 = vshrl.u32 %v178, 7
    %v180 = vsub.s32 0, %v179
    %v181 = vrot.slane %v143, %v180
    %v182 = vlaneseq
    %v183 = vshrl.u32 %v182, 7
    %v184 = vsub.s32 1, %v183
    %v185 = vrot.slane %v143, %v184
    %v186 = vlaneseq
    %v187 = vshrl.u32 %v186, 7
    %v188 = vsub.s32 2, %v187
    %v189 = vrot.slane %v143, %v188
    %v190 = vlaneseq
    %v191 = vshrl.u32 %v190, 7
    %v192 = vsub.s32 3, %v191
    %v193 = vrot.slane %v143, %v192
    %v254 = vunpack.c.l.b16 %v94
    %v255 = vunpack.c.h.b16 %v94
    %v256 = vunpack.c.l.b16 %v95
    %v257 = vunpack.c.h.b16 %v95
    %v258 = vunpack.c.l.b16 %v96
    %v259 = vunpack.c.h.b16 %v96
    %v260 = vunpack.c.l.b16 %v97
    %v261 = vunpack.c.h.b16 %v97
    %v262 = vunpack.c.l.b16 %v98
    %v263 = vunpack.c.h.b16 %v98
    %v264 = vunpack.c.l.b16 %v99
    %v265 = vunpack.c.h.b16 %v99
    %v266 = vunpack.c.l.b16 %v100
    %v267 = vunpack.c.h.b16 %v100
    %v268 = vunpack.c.l.b16 %v101
    %v269 = vunpack.c.h.b16 %v101
    %v270 = vunpack.c.l.b16 %v102
    %v271 = vunpack.c.h.b16 %v102
    %v272 = vunpack.c.l.b16 %v103
    %v273 = vunpack.c.h.b16 %v103
    %v274 = vunpack.c.l.b16 %v104
    %v275 = vunpack.c.h.b16 %v104
    %v276 = vunpack.c.l.b16 %v105
    %v277 = vunpack.c.h.b16 %v105
    %v278 = vunpack.c.l.b16 %v106
    %v279 = vunpack.c.h.b16 %v106
    %v280 = vunpack.c.l.b16 %v107
    %v281 = vunpack.c.h.b16 %v107
    %v282 = vunpack.c.l.b16 %v108
    %v283 = vunpack.c.h.b16 %v108
    %v284 = vunpack.c.l.b16 %v109
    %v285 = vunpack.c.h.b16 %v109
    %v286 = vunpack.c.l.b16 %v110
    %v287 = vunpack.c.h.b16 %v110
    %v288 = vunpack.c.l.b16 %v111
    %v289 = vunpack.c.h.b16 %v111
    %v290 = vunpack.c.l.b16 %v112
    %v291 = vunpack.c.h.b16 %v112
    %v292 = vunpack.c.l.b16 %v113
    %v293 = vunpack.c.h.b16 %v113
    %v294 = vunpack.c.l.b16 %v114
    %v295 = vunpack.c.h.b16 %v114
    %v296 = vunpack.c.l.b16 %v115
    %v297 = vunpack.c.h.b16 %v115
    %v298 = vunpack.c.l.b16 %v116
    %v299 = vunpack.c.h.b16 %v116
    %v300 = vunpack.c.l.b16 %v117
    %v301 = vunpack.c.h.b16 %v117
    %v302 = vunpack.c.l.b16 %v118
    %v303 = vunpack.c.h.b16 %v118
    %v304 = vunpack.c.l.b16 %v119
    %v305 = vunpack.c.h.b16 %v119
    %v306 = vunpack.c.l.b16 %v120
    %v307 = vunpack.c.h.b16 %v120
    %v308 = vunpack.c.l.b16 %v121
    %v309 = vunpack.c.h.b16 %v121
    %v310 = vunpack.c.l.b16 %v122
    %v311 = vunpack.c.h.b16 %v122
    %v312 = vunpack.c.l.b16 %v123
    %v313 = vunpack.c.h.b16 %v123
    %v314 = vunpack.c.l.b16 %v124
    %v315 = vunpack.c.h.b16 %v124
    %v316 = vunpack.c.l.b16 %v125
    %v317 = vunpack.c.h.b16 %v125
    %v318 = vunpack.c.l.b16 %v126
    %v319 = vunpack.c.h.b16 %v126
    %v320 = vunpack.c.l.b16 %v127
    %v321 = vunpack.c.h.b16 %v127
    %v322 = vunpack.c.l.b16 %v128
    %v323 = vunpack.c.h.b16 %v128
    %v324 = vunpack.c.l.b16 %v129
    %v325 = vunpack.c.h.b16 %v129
    %v326 = vunpack.c.l.b16 %v130
    %v327 = vunpack.c.h.b16 %v130
    %v328 = vunpack.c.l.b16 %v131
    %v329 = vunpack.c.h.b16 %v131
    %v330 = vunpack.c.l.b16 %v132
    %v331 = vunpack.c.h.b16 %v132
    %v332 = vunpack.c.l.b16 %v133
    %v333 = vunpack.c.h.b16 %v133
    %v334 = vunpack.c.l.b16 %v134
    %v335 = vunpack.c.h.b16 %v134
    %v336 = vunpack.c.l.b16 %v135
    %v337 = vunpack.c.h.b16 %v135
    %v338 = vunpack.c.l.b16 %v136
    %v339 = vunpack.c.h.b16 %v136
    %v340 = vunpack.c.l.b16 %v137
    %v341 = vunpack.c.h.b16 %v137
    %v342 = vunpack.c.l.b16 %v138
    %v343 = vunpack.c.h.b16 %v138
    %v344 = vunpack.c.l.b16 %v139
    %v345 = vunpack.c.h.b16 %v139
    %v346 = vunpack.c.l.b16 %v140
    %v347 = vunpack.c.h.b16 %v140
    %v348 = vunpack.c.l.b16 %v141
    %v349 = vunpack.c.h.b16 %v141
    %v350 = vpack.c.b16 %v266, %v254
    %v351 = vpack.c.b16 %v267, %v255
    %v352 = vpack.c.b16 %v268, %v256
    %v353 = vpack.c.b16 %v269, %v257
    %v354 = vpack.c.b16 %v270, %v258
    %v355 = vpack.c.b16 %v271, %v259
    %v356 = vpack.c.b16 %v272, %v260
    %v357 = vpack.c.b16 %v273, %v261
    %v358 = vpack.c.b16 %v274, %v262
    %v359 = vpack.c.b16 %v275, %v263
    %v360 = vpack.c.b16 %v276, %v264
    %v361 = vpack.c.b16 %v277, %v265
    %v362 = vpack.c.b16 %v290, %v278
    %v363 = vpack.c.b16 %v291, %v279
    %v364 = vpack.c.b16 %v292, %v280
    %v365 = vpack.c.b16 %v293, %v281
    %v366 = vpack.c.b16 %v294, %v282
    %v367 = vpack.c.b16 %v295, %v283
    %v368 = vpack.c.b16 %v296, %v284
    %v369 = vpack.c.b16 %v297, %v285
    %v370 = vpack.c.b16 %v298, %v286
    %v371 = vpack.c.b16 %v299, %v287
    %v372 = vpack.c.b16 %v300, %v288
    %v373 = vpack.c.b16 %v301, %v289
    %v374 = vpack.c.b16 %v314, %v302
    %v375 = vpack.c.b16 %v315, %v303
    %v376 = vpack.c.b16 %v316, %v304
    %v377 = vpack.c.b16 %v317, %v305
    %v378 = vpack.c.b16 %v318, %v306
    %v379 = vpack.c.b16 %v319, %v307
    %v380 = vpack.c.b16 %v320, %v308
    %v381 = vpack.c.b16 %v321, %v309
    %v382 = vpack.c.b16 %v322, %v310
    %v383 = vpack.c.b16 %v323, %v311
    %v384 = vpack.c.b16 %v324, %v312
    %v385 = vpack.c.b16 %v325, %v313
    %v386 = vpack.c.b16 %v338, %v326
    %v387 = vpack.c.b16 %v339, %v327
    %v388 = vpack.c.b16 %v340, %v328
    %v389 = vpack.c.b16 %v341, %v329
    %v390 = vpack.c.b16 %v342, %v330
    %v391 = vpack.c.b16 %v343, %v331
    %v392 = vpack.c.b16 %v344, %v332
    %v393 = vpack.c.b16 %v345, %v333
    %v394 = vpack.c.b16 %v346, %v334
    %v395 = vpack.c.b16 %v347, %v335
    %v396 = vpack.c.b16 %v348, %v336
    %v397 = vpack.c.b16 %v349, %v337
    %vm446 = vcmask 523264
    %v448 = vsel %vm446, %v93, 0
    %450 = vmatprep.subr.bf16.mxu0 %v351
    %451 = vmatpush1.bf16.msra.mxu0 %v350
    %452 = vmatprep.subr.bf16.mxu0 %v363
    %453 = vmatpush1.bf16.msra.mxu0 %v362
    %454 = vmatprep.subr.bf16.mxu0 %v375
    %455 = vmatpush1.bf16.msra.mxu0 %v374
    %456 = vmatprep.subr.bf16.mxu0 %v387
    %457 = vmatpush1.bf16.msra.mxu0 %v386
    %458 = vmatprep.subr.bf16.mxu0 0
    %459 = vmatpush1.bf16.msra.mxu0 0
    %460 = vmatprep.subr.bf16.mxu0 0
    %461 = vmatpush1.bf16.msra.mxu0 0
    %462 = vmatprep.subr.bf16.mxu0 0
    %463 = vmatpush1.bf16.msra.mxu0 0
    %464 = vmatprep.subr.bf16.mxu0 0
    %465 = vmatpush1.bf16.msra.mxu0 0
    %466 = vmatprep.subr.bf16.mxu0 0
    %467 = vmatpush1.bf16.msra.mxu0 0
    %468 = vmatprep.subr.bf16.mxu0 0
    %469 = vmatpush1.bf16.msra.mxu0 0
    %470 = vmatprep.subr.bf16.mxu0 0
    %471 = vmatpush1.bf16.msra.mxu0 0
    %472 = vmatprep.subr.bf16.mxu0 0
    %473 = vmatpush1.bf16.msra.mxu0 0
    %474 = vmatprep.subr.bf16.mxu0 0
    %475 = vmatpush1.bf16.msra.mxu0 0
    %476 = vmatprep.subr.bf16.mxu0 0
    %477 = vmatpush1.bf16.msra.mxu0 0
    %478 = vmatprep.subr.bf16.mxu0 0
    %479 = vmatpush1.bf16.msra.mxu0 0
    %480 = vmatprep.subr.bf16.mxu0 0
    %481 = vmatpush1.bf16.msra.mxu0 0
    %482 = vmatprep.mubr.bf16.mxu0 0
    %483 = vmatmul.mubr.bf16.gmra.mrb[0].mxu0 %v448
    %v484 = vpop.f32.mrb[0].mxu0
    %v485 = vadd.f32 %v149, %v484
    %v486 = vpop.f32.mrb[0].mxu0
    %v487 = vadd.f32 %v153, %v486
    %v488 = vpop.f32.mrb[0].mxu0
    %v489 = vpop.f32.mrb[0].mxu0
    %490 = vdwg.mxu0
    %491 = vmatprep.subr.bf16.mxu0 %v353
    %492 = vmatpush1.bf16.msra.mxu0 %v352
    %493 = vmatprep.subr.bf16.mxu0 %v365
    %494 = vmatpush1.bf16.msra.mxu0 %v364
    %495 = vmatprep.subr.bf16.mxu0 %v377
    %496 = vmatpush1.bf16.msra.mxu0 %v376
    %497 = vmatprep.subr.bf16.mxu0 %v389
    %498 = vmatpush1.bf16.msra.mxu0 %v388
    %499 = vmatprep.subr.bf16.mxu0 0
    %500 = vmatpush1.bf16.msra.mxu0 0
    %501 = vmatprep.subr.bf16.mxu0 0
    %502 = vmatpush1.bf16.msra.mxu0 0
    %503 = vmatprep.subr.bf16.mxu0 0
    %504 = vmatpush1.bf16.msra.mxu0 0
    %505 = vmatprep.subr.bf16.mxu0 0
    %506 = vmatpush1.bf16.msra.mxu0 0
    %507 = vmatprep.subr.bf16.mxu0 0
    %508 = vmatpush1.bf16.msra.mxu0 0
    %509 = vmatprep.subr.bf16.mxu0 0
    %510 = vmatpush1.bf16.msra.mxu0 0
    %511 = vmatprep.subr.bf16.mxu0 0
    %512 = vmatpush1.bf16.msra.mxu0 0
    %513 = vmatprep.subr.bf16.mxu0 0
    %514 = vmatpush1.bf16.msra.mxu0 0
    %515 = vmatprep.subr.bf16.mxu0 0
    %516 = vmatpush1.bf16.msra.mxu0 0
    %517 = vmatprep.subr.bf16.mxu0 0
    %518 = vmatpush1.bf16.msra.mxu0 0
    %519 = vmatprep.subr.bf16.mxu0 0
    %520 = vmatpush1.bf16.msra.mxu0 0
    %521 = vmatprep.subr.bf16.mxu0 0
    %522 = vmatpush1.bf16.msra.mxu0 0
    %523 = vmatprep.mubr.bf16.mxu0 0
    %524 = vmatmul.mubr.bf16.gmra.mrb[0].mxu0 %v448
    %v525 = vpop.f32.mrb[0].mxu0
    %v526 = vadd.f32 %v157, %v525
    %v527 = vpop.f32.mrb[0].mxu0
    %v528 = vadd.f32 %v161, %v527
    %v529 = vpop.f32.mrb[0].mxu0
    %v530 = vpop.f32.mrb[0].mxu0
    %531 = vdwg.mxu0
    %532 = vmatprep.subr.bf16.mxu0 %v355
    %533 = vmatpush1.bf16.msra.mxu0 %v354
    %534 = vmatprep.subr.bf16.mxu0 %v367
    %535 = vmatpush1.bf16.msra.mxu0 %v366
    %536 = vmatprep.subr.bf16.mxu0 %v379
    %537 = vmatpush1.bf16.msra.mxu0 %v378
    %538 = vmatprep.subr.bf16.mxu0 %v391
    %539 = vmatpush1.bf16.msra.mxu0 %v390
    %540 = vmatprep.subr.bf16.mxu0 0
    %541 = vmatpush1.bf16.msra.mxu0 0
    %542 = vmatprep.subr.bf16.mxu0 0
    %543 = vmatpush1.bf16.msra.mxu0 0
    %544 = vmatprep.subr.bf16.mxu0 0
    %545 = vmatpush1.bf16.msra.mxu0 0
    %546 = vmatprep.subr.bf16.mxu0 0
    %547 = vmatpush1.bf16.msra.mxu0 0
    %548 = vmatprep.subr.bf16.mxu0 0
    %549 = vmatpush1.bf16.msra.mxu0 0
    %550 = vmatprep.subr.bf16.mxu0 0
    %551 = vmatpush1.bf16.msra.mxu0 0
    %552 = vmatprep.subr.bf16.mxu0 0
    %553 = vmatpush1.bf16.msra.mxu0 0
    %554 = vmatprep.subr.bf16.mxu0 0
    %555 = vmatpush1.bf16.msra.mxu0 0
    %556 = vmatprep.subr.bf16.mxu0 0
    %557 = vmatpush1.bf16.msra.mxu0 0
    %558 = vmatprep.subr.bf16.mxu0 0
    %559 = vmatpush1.bf16.msra.mxu0 0
    %560 = vmatprep.subr.bf16.mxu0 0
    %561 = vmatpush1.bf16.msra.mxu0 0
    %562 = vmatprep.subr.bf16.mxu0 0
    %563 = vmatpush1.bf16.msra.mxu0 0
    %564 = vmatprep.mubr.bf16.mxu0 0
    %565 = vmatmul.mubr.bf16.gmra.mrb[0].mxu0 %v448
    %v566 = vpop.f32.mrb[0].mxu0
    %v567 = vadd.f32 %v165, %v566
    %v568 = vpop.f32.mrb[0].mxu0
    %v569 = vadd.f32 %v169, %v568
    %v570 = vpop.f32.mrb[0].mxu0
    %v571 = vpop.f32.mrb[0].mxu0
    %572 = vdwg.mxu0
    %573 = vmatprep.subr.bf16.mxu0 %v357
    %574 = vmatpush1.bf16.msra.mxu0 %v356
    %575 = vmatprep.subr.bf16.mxu0 %v369
    %576 = vmatpush1.bf16.msra.mxu0 %v368
    %577 = vmatprep.subr.bf16.mxu0 %v381
    %578 = vmatpush1.bf16.msra.mxu0 %v380
    %579 = vmatprep.subr.bf16.mxu0 %v393
    %580 = vmatpush1.bf16.msra.mxu0 %v392
    %581 = vmatprep.subr.bf16.mxu0 0
    %582 = vmatpush1.bf16.msra.mxu0 0
    %583 = vmatprep.subr.bf16.mxu0 0
    %584 = vmatpush1.bf16.msra.mxu0 0
    %585 = vmatprep.subr.bf16.mxu0 0
    %586 = vmatpush1.bf16.msra.mxu0 0
    %587 = vmatprep.subr.bf16.mxu0 0
    %588 = vmatpush1.bf16.msra.mxu0 0
    %589 = vmatprep.subr.bf16.mxu0 0
    %590 = vmatpush1.bf16.msra.mxu0 0
    %591 = vmatprep.subr.bf16.mxu0 0
    %592 = vmatpush1.bf16.msra.mxu0 0
    %593 = vmatprep.subr.bf16.mxu0 0
    %594 = vmatpush1.bf16.msra.mxu0 0
    %595 = vmatprep.subr.bf16.mxu0 0
    %596 = vmatpush1.bf16.msra.mxu0 0
    %597 = vmatprep.subr.bf16.mxu0 0
    %598 = vmatpush1.bf16.msra.mxu0 0
    %599 = vmatprep.subr.bf16.mxu0 0
    %600 = vmatpush1.bf16.msra.mxu0 0
    %601 = vmatprep.subr.bf16.mxu0 0
    %602 = vmatpush1.bf16.msra.mxu0 0
    %603 = vmatprep.subr.bf16.mxu0 0
    %604 = vmatpush1.bf16.msra.mxu0 0
    %605 = vmatprep.mubr.bf16.mxu0 0
    %606 = vmatmul.mubr.bf16.gmra.mrb[0].mxu0 %v448
    %v607 = vpop.f32.mrb[0].mxu0
    %v608 = vadd.f32 %v173, %v607
    %v609 = vpop.f32.mrb[0].mxu0
    %v610 = vadd.f32 %v177, %v609
    %v611 = vpop.f32.mrb[0].mxu0
    %v612 = vpop.f32.mrb[0].mxu0
    %613 = vdwg.mxu0
    %614 = vmatprep.subr.bf16.mxu0 %v359
    %615 = vmatpush1.bf16.msra.mxu0 %v358
    %616 = vmatprep.subr.bf16.mxu0 %v371
    %617 = vmatpush1.bf16.msra.mxu0 %v370
    %618 = vmatprep.subr.bf16.mxu0 %v383
    %619 = vmatpush1.bf16.msra.mxu0 %v382
    %620 = vmatprep.subr.bf16.mxu0 %v395
    %621 = vmatpush1.bf16.msra.mxu0 %v394
    %622 = vmatprep.subr.bf16.mxu0 0
    %623 = vmatpush1.bf16.msra.mxu0 0
    %624 = vmatprep.subr.bf16.mxu0 0
    %625 = vmatpush1.bf16.msra.mxu0 0
    %626 = vmatprep.subr.bf16.mxu0 0
    %627 = vmatpush1.bf16.msra.mxu0 0
    %628 = vmatprep.subr.bf16.mxu0 0
    %629 = vmatpush1.bf16.msra.mxu0 0
    %630 = vmatprep.subr.bf16.mxu0 0
    %631 = vmatpush1.bf16.msra.mxu0 0
    %632 = vmatprep.subr.bf16.mxu0 0
    %633 = vmatpush1.bf16.msra.mxu0 0
    %634 = vmatprep.subr.bf16.mxu0 0
    %635 = vmatpush1.bf16.msra.mxu0 0
    %636 = vmatprep.subr.bf16.mxu0 0
    %637 = vmatpush1.bf16.msra.mxu0 0
    %638 = vmatprep.subr.bf16.mxu0 0
    %639 = vmatpush1.bf16.msra.mxu0 0
    %640 = vmatprep.subr.bf16.mxu0 0
    %641 = vmatpush1.bf16.msra.mxu0 0
    %642 = vmatprep.subr.bf16.mxu0 0
    %643 = vmatpush1.bf16.msra.mxu0 0
    %644 = vmatprep.subr.bf16.mxu0 0
    %645 = vmatpush1.bf16.msra.mxu0 0
    %646 = vmatprep.mubr.bf16.mxu0 0
    %647 = vmatmul.mubr.bf16.gmra.mrb[0].mxu0 %v448
    %v648 = vpop.f32.mrb[0].mxu0
    %v649 = vadd.f32 %v181, %v648
    %v650 = vpop.f32.mrb[0].mxu0
    %v651 = vadd.f32 %v185, %v650
    %v652 = vpop.f32.mrb[0].mxu0
    %v653 = vpop.f32.mrb[0].mxu0
    %654 = vdwg.mxu0
    %655 = vmatprep.subr.bf16.mxu0 %v361
    %656 = vmatpush1.bf16.msra.mxu0 %v360
    %657 = vmatprep.subr.bf16.mxu0 %v373
    %658 = vmatpush1.bf16.msra.mxu0 %v372
    %659 = vmatprep.subr.bf16.mxu0 %v385
    %660 = vmatpush1.bf16.msra.mxu0 %v384
    %661 = vmatprep.subr.bf16.mxu0 %v397
    %662 = vmatpush1.bf16.msra.mxu0 %v396
    %663 = vmatprep.subr.bf16.mxu0 0
    %664 = vmatpush1.bf16.msra.mxu0 0
    %665 = vmatprep.subr.bf16.mxu0 0
    %666 = vmatpush1.bf16.msra.mxu0 0
    %667 = vmatprep.subr.bf16.mxu0 0
    %668 = vmatpush1.bf16.msra.mxu0 0
    %669 = vmatprep.subr.bf16.mxu0 0
    %670 = vmatpush1.bf16.msra.mxu0 0
    %671 = vmatprep.subr.bf16.mxu0 0
    %672 = vmatpush1.bf16.msra.mxu0 0
    %673 = vmatprep.subr.bf16.mxu0 0
    %674 = vmatpush1.bf16.msra.mxu0 0
    %675 = vmatprep.subr.bf16.mxu0 0
    %676 = vmatpush1.bf16.msra.mxu0 0
    %677 = vmatprep.subr.bf16.mxu0 0
    %678 = vmatpush1.bf16.msra.mxu0 0
    %679 = vmatprep.subr.bf16.mxu0 0
    %680 = vmatpush1.bf16.msra.mxu0 0
    %681 = vmatprep.subr.bf16.mxu0 0
    %682 = vmatpush1.bf16.msra.mxu0 0
    %683 = vmatprep.subr.bf16.mxu0 0
    %684 = vmatpush1.bf16.msra.mxu0 0
    %685 = vmatprep.subr.bf16.mxu0 0
    %686 = vmatpush1.bf16.msra.mxu0 0
    %687 = vmatprep.mubr.bf16.mxu0 0
    %688 = vmatmul.mubr.bf16.gmra.mrb[0].mxu0 %v448
    %v689 = vpop.f32.mrb[0].mxu0
    %v690 = vadd.f32 %v189, %v689
    %v691 = vpop.f32.mrb[0].mxu0
    %v692 = vadd.f32 %v193, %v691
    %v693 = vpop.f32.mrb[0].mxu0
    %v694 = vpop.f32.mrb[0].mxu0
    %695 = vdwg.mxu0
    %v696 = vmul.f32 %v485, 0.5
    %v697 = vmul.f32 %v487, 0.5
    %v698 = vmul.f32 %v526, 0.5
    %v699 = vmul.f32 %v528, 0.5
    %v700 = vmul.f32 %v567, 0.5
    %v701 = vmul.f32 %v569, 0.5
    %v702 = vmul.f32 %v608, 0.5
    %v703 = vmul.f32 %v610, 0.5
    %v704 = vtanh.pop %v696
    %v705 = vtanh.pop %v697
    %v706 = vtanh.pop %v698
    %v707 = vtanh.pop %v699
    %v708 = vtanh.pop %v700
    %v709 = vtanh.pop %v701
    %v710 = vtanh.pop %v702
    %v711 = vtanh.pop %v703
    %v712 = vadd.f32 %v704, 1.0
    %v713 = vadd.f32 %v705, 1.0
    %v714 = vadd.f32 %v706, 1.0
    %v715 = vadd.f32 %v707, 1.0
    %v716 = vadd.f32 %v708, 1.0
    %v717 = vadd.f32 %v709, 1.0
    %v718 = vadd.f32 %v710, 1.0
    %v719 = vadd.f32 %v711, 1.0
    %v720 = vmul.f32 %v712, 0.5
    %v721 = vmul.f32 %v713, 0.5
    %v722 = vmul.f32 %v714, 0.5
    %v723 = vmul.f32 %v715, 0.5
    %v724 = vmul.f32 %v716, 0.5
    %v725 = vmul.f32 %v717, 0.5
    %v726 = vmul.f32 %v718, 0.5
    %v727 = vmul.f32 %v719, 0.5
    %v728 = vtanh.pop %v649
    %v729 = vtanh.pop %v651
    %v730 = vtanh.pop %v690
    %v731 = vtanh.pop %v692
    %v732 = vmul.f32 %v720, %v728
    %v733 = vmul.f32 %v721, %v729
    %v734 = vmul.f32 %v722, %v730
    %v735 = vmul.f32 %v723, %v731
    %v736 = vtanh.pop %v732
    %v737 = vtanh.pop %v733
    %v738 = vtanh.pop %v734
    %v739 = vtanh.pop %v735
    %v740 = vmul.f32 %v724, %v736
    %v741 = vmul.f32 %v725, %v737
    %v742 = vmul.f32 %v726, %v738
    %v743 = vmul.f32 %v727, %v739
    %v744 = vpack.c.bf16 %v740, %v740
    %v745 = vpack.c.bf16 %v741, %v741
    %v746 = vpack.c.bf16 %v742, %v742
    %v747 = vpack.c.bf16 %v743, %v743
    %v748 = vld [vmem:[#allocation8] sm:$0xf]
    %v749 = vld [vmem:[#allocation8 + $0x4] sm:$0xf]
    %v750 = vld [vmem:[#allocation8 + $0x8] sm:$0xf]
    %v751 = vld [vmem:[#allocation8 + $0xc] sm:$0xf]
    %v752 = vld [vmem:[#allocation8 + $0x10] sm:$0xf]
    %v753 = vld [vmem:[#allocation8 + $0x14] sm:$0xf]
    %v754 = vld [vmem:[#allocation8 + $0x18] sm:$0xf]
    %v755 = vld [vmem:[#allocation8 + $0x1c] sm:$0xf]
    %v756 = vld [vmem:[#allocation8 + $0x20] sm:$0xf]
    %v757 = vld [vmem:[#allocation8 + $0x24] sm:$0xf]
    %v758 = vld [vmem:[#allocation8 + $0x28] sm:$0xf]
    %v759 = vld [vmem:[#allocation8 + $0x2c] sm:$0xf]
    %v760 = vld [vmem:[#allocation8 + $0x30] sm:$0xf]
    %v761 = vld [vmem:[#allocation8 + $0x34] sm:$0xf]
    %v762 = vld [vmem:[#allocation8 + $0x38] sm:$0xf]
    %v763 = vld [vmem:[#allocation8 + $0x3c] sm:$0xf]
    %v764 = vld [vmem:[#allocation8 + $0x40] sm:$0xf]
    %v765 = vld [vmem:[#allocation8 + $0x44] sm:$0xf]
    %v766 = vld [vmem:[#allocation8 + $0x48] sm:$0xf]
    %v767 = vld [vmem:[#allocation8 + $0x4c] sm:$0xf]
    %v768 = vld [vmem:[#allocation8 + $0x50] sm:$0xf]
    %v769 = vld [vmem:[#allocation8 + $0x54] sm:$0xf]
    %v770 = vld [vmem:[#allocation8 + $0x58] sm:$0xf]
    %v771 = vld [vmem:[#allocation8 + $0x5c] sm:$0xf]
    %v772 = vld [vmem:[#allocation8 + $0x60] sm:$0xf]
    %v773 = vld [vmem:[#allocation8 + $0x64] sm:$0xf]
    %v774 = vld [vmem:[#allocation8 + $0x68] sm:$0xf]
    %v775 = vld [vmem:[#allocation8 + $0x6c] sm:$0xf]
    %v776 = vld [vmem:[#allocation8 + $0x70] sm:$0xf]
    %v777 = vld [vmem:[#allocation8 + $0x74] sm:$0xf]
    %v778 = vld [vmem:[#allocation8 + $0x78] sm:$0xf]
    %v779 = vld [vmem:[#allocation8 + $0x7c] sm:$0xf]
    %v780 = vld [vmem:[#allocation8 + $0x80] sm:$0xf]
    %v781 = vld [vmem:[#allocation8 + $0x84] sm:$0xf]
    %v782 = vld [vmem:[#allocation8 + $0x88] sm:$0xf]
    %v783 = vld [vmem:[#allocation8 + $0x8c] sm:$0xf]
    %v784 = vld [vmem:[#allocation8 + $0x90] sm:$0xf]
    %v785 = vld [vmem:[#allocation8 + $0x94] sm:$0xf]
    %v786 = vld [vmem:[#allocation8 + $0x98] sm:$0xf]
    %v787 = vld [vmem:[#allocation8 + $0x9c] sm:$0xf]
    %v788 = vld [vmem:[#allocation8 + $0xa0] sm:$0xf]
    %v789 = vld [vmem:[#allocation8 + $0xa4] sm:$0xf]
    %v790 = vld [vmem:[#allocation8 + $0xa8] sm:$0xf]
    %v791 = vld [vmem:[#allocation8 + $0xac] sm:$0xf]
    %v792 = vld [vmem:[#allocation8 + $0xb0] sm:$0xf]
    %v793 = vld [vmem:[#allocation8 + $0xb4] sm:$0xf]
    %v794 = vld [vmem:[#allocation8 + $0xb8] sm:$0xf]
    %v795 = vld [vmem:[#allocation8 + $0xbc] sm:$0xf]
    %v796 = vld [vmem:[#allocation8 + $0xc0] sm:$0xf]
    %v797 = vld [vmem:[#allocation8 + $0xc4] sm:$0xf]
    %v798 = vld [vmem:[#allocation8 + $0xc8] sm:$0xf]
    %v799 = vld [vmem:[#allocation8 + $0xcc] sm:$0xf]
    %v800 = vld [vmem:[#allocation8 + $0xd0] sm:$0xf]
    %v801 = vld [vmem:[#allocation8 + $0xd4] sm:$0xf]
    %v802 = vld [vmem:[#allocation8 + $0xd8] sm:$0xf]
    %v803 = vld [vmem:[#allocation8 + $0xdc] sm:$0xf]
    %v804 = vld [vmem:[#allocation8 + $0xe0] sm:$0xf]
    %v805 = vld [vmem:[#allocation8 + $0xe4] sm:$0xf]
    %v806 = vld [vmem:[#allocation8 + $0xe8] sm:$0xf]
    %v807 = vld [vmem:[#allocation8 + $0xec] sm:$0xf]
    %v808 = vld [vmem:[#allocation8 + $0xf0] sm:$0xf]
    %v809 = vld [vmem:[#allocation8 + $0xf4] sm:$0xf]
    %v810 = vld [vmem:[#allocation8 + $0xf8] sm:$0xf]
    %v811 = vld [vmem:[#allocation8 + $0xfc] sm:$0xf]
    %v812 = vld [vmem:[%s4] sm:$0x1]
    %v814 = vlaneseq
    %v815 = vshrl.u32 %v814, 7
    %v816 = vsub.s32 0, %v815
    %v817 = vrot.slane %v812, %v816
    %v883 = vunpack.c.l.b16 %v748
    %v884 = vunpack.c.l.b16 %v749
    %v885 = vunpack.c.l.b16 %v750
    %v886 = vunpack.c.l.b16 %v751
    %v887 = vunpack.c.l.b16 %v752
    %v888 = vunpack.c.l.b16 %v753
    %v889 = vunpack.c.l.b16 %v754
    %v890 = vunpack.c.l.b16 %v755
    %v891 = vunpack.c.l.b16 %v756
    %v892 = vunpack.c.l.b16 %v757
    %v893 = vunpack.c.l.b16 %v758
    %v894 = vunpack.c.l.b16 %v759
    %v895 = vunpack.c.l.b16 %v760
    %v896 = vunpack.c.l.b16 %v761
    %v897 = vunpack.c.l.b16 %v762
    %v898 = vunpack.c.l.b16 %v763
    %v899 = vunpack.c.l.b16 %v764
    %v900 = vunpack.c.l.b16 %v765
    %v901 = vunpack.c.l.b16 %v766
    %v902 = vunpack.c.l.b16 %v767
    %v903 = vunpack.c.l.b16 %v768
    %v904 = vunpack.c.l.b16 %v769
    %v905 = vunpack.c.l.b16 %v770
    %v906 = vunpack.c.l.b16 %v771
    %v907 = vunpack.c.l.b16 %v772
    %v908 = vunpack.c.l.b16 %v773
    %v909 = vunpack.c.l.b16 %v774
    %v910 = vunpack.c.l.b16 %v775
    %v911 = vunpack.c.l.b16 %v776
    %v912 = vunpack.c.l.b16 %v777
    %v913 = vunpack.c.l.b16 %v778
    %v914 = vunpack.c.l.b16 %v779
    %v915 = vunpack.c.l.b16 %v780
    %v916 = vunpack.c.l.b16 %v781
    %v917 = vunpack.c.l.b16 %v782
    %v918 = vunpack.c.l.b16 %v783
    %v919 = vunpack.c.l.b16 %v784
    %v920 = vunpack.c.l.b16 %v785
    %v921 = vunpack.c.l.b16 %v786
    %v922 = vunpack.c.l.b16 %v787
    %v923 = vunpack.c.l.b16 %v788
    %v924 = vunpack.c.l.b16 %v789
    %v925 = vunpack.c.l.b16 %v790
    %v926 = vunpack.c.l.b16 %v791
    %v927 = vunpack.c.l.b16 %v792
    %v928 = vunpack.c.l.b16 %v793
    %v929 = vunpack.c.l.b16 %v794
    %v930 = vunpack.c.l.b16 %v795
    %v931 = vunpack.c.l.b16 %v796
    %v932 = vunpack.c.l.b16 %v797
    %v933 = vunpack.c.l.b16 %v798
    %v934 = vunpack.c.l.b16 %v799
    %v935 = vunpack.c.l.b16 %v800
    %v936 = vunpack.c.l.b16 %v801
    %v937 = vunpack.c.l.b16 %v802
    %v938 = vunpack.c.l.b16 %v803
    %v939 = vunpack.c.l.b16 %v804
    %v940 = vunpack.c.l.b16 %v805
    %v941 = vunpack.c.l.b16 %v806
    %v942 = vunpack.c.l.b16 %v807
    %v943 = vunpack.c.l.b16 %v808
    %v944 = vunpack.c.l.b16 %v809
    %v945 = vunpack.c.l.b16 %v810
    %v946 = vunpack.c.l.b16 %v811
    %v947 = vpack.c.b16 %v884, %v883
    %v948 = vpack.c.b16 %v886, %v885
    %v949 = vpack.c.b16 %v888, %v887
    %v950 = vpack.c.b16 %v890, %v889
    %v951 = vpack.c.b16 %v892, %v891
    %v952 = vpack.c.b16 %v894, %v893
    %v953 = vpack.c.b16 %v896, %v895
    %v954 = vpack.c.b16 %v898, %v897
    %v955 = vpack.c.b16 %v900, %v899
    %v956 = vpack.c.b16 %v902, %v901
    %v957 = vpack.c.b16 %v904, %v903
    %v958 = vpack.c.b16 %v906, %v905
    %v959 = vpack.c.b16 %v908, %v907
    %v960 = vpack.c.b16 %v910, %v909
    %v961 = vpack.c.b16 %v912, %v911
    %v962 = vpack.c.b16 %v914, %v913
    %v963 = vpack.c.b16 %v916, %v915
    %v964 = vpack.c.b16 %v918, %v917
    %v965 = vpack.c.b16 %v920, %v919
    %v966 = vpack.c.b16 %v922, %v921
    %v967 = vpack.c.b16 %v924, %v923
    %v968 = vpack.c.b16 %v926, %v925
    %v969 = vpack.c.b16 %v928, %v927
    %v970 = vpack.c.b16 %v930, %v929
    %v971 = vpack.c.b16 %v932, %v931
    %v972 = vpack.c.b16 %v934, %v933
    %v973 = vpack.c.b16 %v936, %v935
    %v974 = vpack.c.b16 %v938, %v937
    %v975 = vpack.c.b16 %v940, %v939
    %v976 = vpack.c.b16 %v942, %v941
    %v977 = vpack.c.b16 %v944, %v943
    %v978 = vpack.c.b16 %v946, %v945
    %1011 = vmatprep.subr.bf16.mxu0 0
    %1012 = vmatpush1.bf16.msra.mxu0 %v947
    %1013 = vmatprep.subr.bf16.mxu0 0
    %1014 = vmatpush1.bf16.msra.mxu0 %v948
    %1015 = vmatprep.subr.bf16.mxu0 0
    %1016 = vmatpush1.bf16.msra.mxu0 %v949
    %1017 = vmatprep.subr.bf16.mxu0 0
    %1018 = vmatpush1.bf16.msra.mxu0 %v950
    %1019 = vmatprep.subr.bf16.mxu0 0
    %1020 = vmatpush1.bf16.msra.mxu0 %v951
    %1021 = vmatprep.subr.bf16.mxu0 0
    %1022 = vmatpush1.bf16.msra.mxu0 %v952
    %1023 = vmatprep.subr.bf16.mxu0 0
    %1024 = vmatpush1.bf16.msra.mxu0 %v953
    %1025 = vmatprep.subr.bf16.mxu0 0
    %1026 = vmatpush1.bf16.msra.mxu0 %v954
    %1027 = vmatprep.subr.bf16.mxu0 0
    %1028 = vmatpush1.bf16.msra.mxu0 %v955
    %1029 = vmatprep.subr.bf16.mxu0 0
    %1030 = vmatpush1.bf16.msra.mxu0 %v956
    %1031 = vmatprep.subr.bf16.mxu0 0
    %1032 = vmatpush1.bf16.msra.mxu0 %v957
    %1033 = vmatprep.subr.bf16.mxu0 0
    %1034 = vmatpush1.bf16.msra.mxu0 %v958
    %1035 = vmatprep.subr.bf16.mxu0 0
    %1036 = vmatpush1.bf16.msra.mxu0 %v959
    %1037 = vmatprep.subr.bf16.mxu0 0
    %1038 = vmatpush1.bf16.msra.mxu0 %v960
    %1039 = vmatprep.subr.bf16.mxu0 0
    %1040 = vmatpush1.bf16.msra.mxu0 %v961
    %1041 = vmatprep.subr.bf16.mxu0 0
    %1042 = vmatpush1.bf16.msra.mxu0 %v962
    %1043 = vmatprep.mubr.bf16.mxu0 %v745
    %1044 = vmatmul.mubr.bf16.gmra.mrb[0].mxu0 %v744
    %v1045 = vpop.f32.mrb[0].mxu0
    %v1046 = vadd.f32 %v817, %v1045
    %v1047 = vpop.f32.mrb[0].mxu0
    %v1048 = vpop.f32.mrb[0].mxu0
    %v1049 = vpop.f32.mrb[0].mxu0
    %1050 = vdwg.mxu0
    %1051 = vmatprep.subr.bf16.mxu0 0
    %1052 = vmatpush1.bf16.msra.mxu0 %v963
    %1053 = vmatprep.subr.bf16.mxu0 0
    %1054 = vmatpush1.bf16.msra.mxu0 %v964
    %1055 = vmatprep.subr.bf16.mxu0 0
    %1056 = vmatpush1.bf16.msra.mxu0 %v965
    %1057 = vmatprep.subr.bf16.mxu0 0
    %1058 = vmatpush1.bf16.msra.mxu0 %v966
    %1059 = vmatprep.subr.bf16.mxu0 0
    %1060 = vmatpush1.bf16.msra.mxu0 %v967
    %1061 = vmatprep.subr.bf16.mxu0 0
    %1062 = vmatpush1.bf16.msra.mxu0 %v968
    %1063 = vmatprep.subr.bf16.mxu0 0
    %1064 = vmatpush1.bf16.msra.mxu0 %v969
    %1065 = vmatprep.subr.bf16.mxu0 0
    %1066 = vmatpush1.bf16.msra.mxu0 %v970
    %1067 = vmatprep.subr.bf16.mxu0 0
    %1068 = vmatpush1.bf16.msra.mxu0 %v971
    %1069 = vmatprep.subr.bf16.mxu0 0
    %1070 = vmatpush1.bf16.msra.mxu0 %v972
    %1071 = vmatprep.subr.bf16.mxu0 0
    %1072 = vmatpush1.bf16.msra.mxu0 %v973
    %1073 = vmatprep.subr.bf16.mxu0 0
    %1074 = vmatpush1.bf16.msra.mxu0 %v974
    %1075 = vmatprep.subr.bf16.mxu0 0
    %1076 = vmatpush1.bf16.msra.mxu0 %v975
    %1077 = vmatprep.subr.bf16.mxu0 0
    %1078 = vmatpush1.bf16.msra.mxu0 %v976
    %1079 = vmatprep.subr.bf16.mxu0 0
    %1080 = vmatpush1.bf16.msra.mxu0 %v977
    %1081 = vmatprep.subr.bf16.mxu0 0
    %1082 = vmatpush1.bf16.msra.mxu0 %v978
    %1083 = vmatprep.mubr.bf16.mxu0 %v747
    %1084 = vmatmul.mubr.bf16.gmra.mrb[0].mxu0 %v746
    %v1085 = vpop.f32.mrb[0].mxu0
    %v1086 = vadd.f32 %v1046, %v1085
    %v1087 = vpop.f32.mrb[0].mxu0
    %v1088 = vpop.f32.mrb[0].mxu0
    %v1089 = vpop.f32.mrb[0].mxu0
    %1090 = vdwg.mxu0
    %v1091 = vmax.f32 %v1086, 0.0
    %v1092 = vpack.c.bf16 %v1091, %v1091
    %v1093 = vld [vmem:[#allocation10] sm:$0xf]
    %v1094 = vld [vmem:[#allocation10 + $0x4] sm:$0xf]
    %v1095 = vld [vmem:[#allocation10 + $0x8] sm:$0xf]
    %v1096 = vld [vmem:[#allocation10 + $0xc] sm:$0xf]
    %v1097 = vld [vmem:[#allocation10 + $0x10] sm:$0xf]
    %v1098 = vld [vmem:[#allocation10 + $0x14] sm:$0xf]
    %v1099 = vld [vmem:[#allocation10 + $0x18] sm:$0xf]
    %v1100 = vld [vmem:[#allocation10 + $0x1c] sm:$0xf]
    %v1101 = vld [vmem:[#allocation10 + $0x20] sm:$0xf]
    %v1102 = vld [vmem:[#allocation10 + $0x24] sm:$0xf]
    %v1103 = vld [vmem:[#allocation10 + $0x28] sm:$0xf]
    %v1104 = vld [vmem:[#allocation10 + $0x2c] sm:$0xf]
    %v1105 = vld [vmem:[#allocation10 + $0x30] sm:$0xf]
    %v1106 = vld [vmem:[#allocation10 + $0x34] sm:$0xf]
    %v1107 = vld [vmem:[#allocation10 + $0x38] sm:$0xf]
    %v1108 = vld [vmem:[#allocation10 + $0x3c] sm:$0xf]
    %v1109 = vld [vmem:[%s6] sm:$0x1]
    %v1111 = vlaneseq
    %v1112 = vshrl.u32 %v1111, 7
    %v1113 = vsub.s32 0, %v1112
    %v1114 = vrot.slane %v1109, %v1113
    %v1132 = vunpack.c.l.b16 %v1093
    %v1133 = vunpack.c.l.b16 %v1094
    %v1134 = vunpack.c.l.b16 %v1095
    %v1135 = vunpack.c.l.b16 %v1096
    %v1136 = vunpack.c.l.b16 %v1097
    %v1137 = vunpack.c.l.b16 %v1098
    %v1138 = vunpack.c.l.b16 %v1099
    %v1139 = vunpack.c.l.b16 %v1100
    %v1140 = vunpack.c.l.b16 %v1101
    %v1141 = vunpack.c.l.b16 %v1102
    %v1142 = vunpack.c.l.b16 %v1103
    %v1143 = vunpack.c.l.b16 %v1104
    %v1144 = vunpack.c.l.b16 %v1105
    %v1145 = vunpack.c.l.b16 %v1106
    %v1146 = vunpack.c.l.b16 %v1107
    %v1147 = vunpack.c.l.b16 %v1108
    %v1148 = vpack.c.b16 %v1133, %v1132
    %v1149 = vpack.c.b16 %v1135, %v1134
    %v1150 = vpack.c.b16 %v1137, %v1136
    %v1151 = vpack.c.b16 %v1139, %v1138
    %v1152 = vpack.c.b16 %v1141, %v1140
    %v1153 = vpack.c.b16 %v1143, %v1142
    %v1154 = vpack.c.b16 %v1145, %v1144
    %v1155 = vpack.c.b16 %v1147, %v1146
    %1164 = vmatprep.subr.bf16.mxu0 0
    %1165 = vmatpush1.bf16.msra.mxu0 %v1148
    %1166 = vmatprep.subr.bf16.mxu0 0
    %1167 = vmatpush1.bf16.msra.mxu0 %v1149
    %1168 = vmatprep.subr.bf16.mxu0 0
    %1169 = vmatpush1.bf16.msra.mxu0 %v1150
    %1170 = vmatprep.subr.bf16.mxu0 0
    %1171 = vmatpush1.bf16.msra.mxu0 %v1151
    %1172 = vmatprep.subr.bf16.mxu0 0
    %1173 = vmatpush1.bf16.msra.mxu0 %v1152
    %1174 = vmatprep.subr.bf16.mxu0 0
    %1175 = vmatpush1.bf16.msra.mxu0 %v1153
    %1176 = vmatprep.subr.bf16.mxu0 0
    %1177 = vmatpush1.bf16.msra.mxu0 %v1154
    %1178 = vmatprep.subr.bf16.mxu0 0
    %1179 = vmatpush1.bf16.msra.mxu0 %v1155
    %1180 = vmatprep.subr.bf16.mxu0 0
    %1181 = vmatpush1.bf16.msra.mxu0 0
    %1182 = vmatprep.subr.bf16.mxu0 0
    %1183 = vmatpush1.bf16.msra.mxu0 0
    %1184 = vmatprep.subr.bf16.mxu0 0
    %1185 = vmatpush1.bf16.msra.mxu0 0
    %1186 = vmatprep.subr.bf16.mxu0 0
    %1187 = vmatpush1.bf16.msra.mxu0 0
    %1188 = vmatprep.subr.bf16.mxu0 0
    %1189 = vmatpush1.bf16.msra.mxu0 0
    %1190 = vmatprep.subr.bf16.mxu0 0
    %1191 = vmatpush1.bf16.msra.mxu0 0
    %1192 = vmatprep.subr.bf16.mxu0 0
    %1193 = vmatpush1.bf16.msra.mxu0 0
    %1194 = vmatprep.subr.bf16.mxu0 0
    %1195 = vmatpush1.bf16.msra.mxu0 0
    %1196 = vmatprep.mubr.bf16.mxu0 0
    %1197 = vmatmul.mubr.bf16.gmra.mrb[0].mxu0 %v1092
    %v1198 = vpop.f32.mrb[0].mxu0
    %v1199 = vadd.f32 %v1114, %v1198
    %v1200 = vpop.f32.mrb[0].mxu0
    %v1201 = vpop.f32.mrb[0].mxu0
    %v1202 = vpop.f32.mrb[0].mxu0
    %1203 = vdwg.mxu0
    %1204 = vmax.xlane.f32.xlu0 %v1199
    %v1205 = vpop.xlane.xlu0 %1204
    %v1206 = vsub.f32 %v1199, %v1205
    %v1207 = vmul.f32 %v1206, 1.442695
    %v1208 = vpow.pop %v1207
    %1209 = vadd.xlane.f32.xlu0 %v1208
    %v1210 = vpop.xlane.xlu0 %1209
    %v1211 = vrcp.pop %v1210
    %v1212 = vmul.f32 %v1208, %v1211
    %1213 = vst [vmem:[#allocation11] sm:$0xff] %v1212
    // Predicated region
    $region50: #{tpu_custom_call.1} parent=1 // pred_check
      _
    $region51: #{tpu_custom_call.1} parent=1 // pred_check_branch
      %1215 = sbr.rel (0) target = $region53
    $region52: #{tpu_custom_call.1} parent=1 // pred_region
      %s1217 = ssub.s32 128, 128
      %1218 = vsyncadd [#allocation4], %s1217
      %s1220 = sshll.u32 [#allocation11], 4
      %s1221 = int_to_ptr.vmem [resolvable:$true] %s1220
      %1223 = dma.vmem_to_hbm [thread:$0]  %s1221, 128, %s7, [#allocation4]
    $region53: #{tpu_custom_call.1} parent=1 // pred_fallthru
      _
    // Predicated region
    $region54: #{tpu_custom_call.1} parent=1 // pred_check
      _
    $region55: #{tpu_custom_call.1} parent=1 // pred_check_branch
      %1225 = sbr.rel (0) target = $region57
    $region56: #{tpu_custom_call.1} parent=1 // pred_region
      %1226 = dma.done [#allocation4], 128
    $region57: #{tpu_custom_call.1} parent=1 // pred_fallthru
      _
    %1227 = vsyncpa [#allocation3], 1
    %1228 = vsyncpa [#allocation6], 1
    %1229 = vsyncpa [#allocation9], 1
    %1230 = vsyncpa [#allocation4], 1

</llo_original>
